<compile_context>
chip_gen: v7x
topology: tpu7x:2x2x1
jax: 0.10.0
libtpu: 0.0.40
codegen_flags: <defaults>
</compile_context>

<pallas_src>
import functools

import jax
import jax.numpy as jnp
from jax import lax
from jax.experimental import pallas as pl
from jax.experimental.pallas import tpu as pltpu

_LANE = 128


@functools.lru_cache(maxsize=None)
def _pltpu_roll_is_neg():
    """True iff pltpu.roll(v, s, axis)[i] == v[(i - s) % N] (jnp.roll convention).

    Determined once with a tiny probe kernel so the main kernel carries no
    runtime convention test.
    """
    def probe(x_ref, o_ref):
        o_ref[...] = pltpu.roll(x_ref[...], shift=1, axis=1)

    x = jnp.tile(jnp.arange(_LANE, dtype=jnp.int32)[None, :], (8, 1))
    out = pl.pallas_call(
        probe, out_shape=jax.ShapeDtypeStruct((8, _LANE), jnp.int32))(x)
    return int(out[0, 0]) == _LANE - 1


def _chip_info():
    """Per-generation VMEM budgets + bf16-VALU availability."""
    kind = ""
    try:
        kind = jax.devices()[0].device_kind.lower()
    except Exception:  # pragma: no cover - defensive
        pass
    if "7" in kind:        # v7x: 64 MiB physical VMEM per TensorCore
        return {"default_scoped": 32 << 20, "physical": 64 << 20, "bf16_vpu": True}
    if "v6" in kind:       # v6e: 128 MiB physical
        return {"default_scoped": 32 << 20, "physical": 128 << 20, "bf16_vpu": True}
    if "v5" in kind:       # v5e/v5p: 16 MiB default scoped limit, no bf16 VALU
        return {"default_scoped": 16 << 20, "physical": 128 << 20, "bf16_vpu": False}
    # v4 / unknown: conservative
    return {"default_scoped": 16 << 20, "physical": 64 << 20, "bf16_vpu": False}


def _emd_kernel(x_ref, o_ref, *, n_valid, chunk_w, sort_dtype, roll_is_neg):
    """One batch tile.

    x_ref: (2*TB, Np) -- rows [0:TB] = generated rows, rows [TB:2*TB] = target
           rows of this tile (stacked in the wrapper). Np = power of two
           multiple of 128; columns >= n_valid hold +inf padding.
    o_ref: (TB, 1) f32 -- per-row sum of squared differences of the sorted rows.
    """
    rows, npad = x_ref.shape
    tb = rows // 2
    cw = chunk_w
    num_chunks = npad // cw

    lane = lax.broadcasted_iota(jnp.int32, (1, cw), 1)

    def roll_from_below(v, s):   # result[l] = v[(l - s) % cw]
        return pltpu.roll(v, shift=(s if roll_is_neg else cw - s), axis=1)

    def roll_from_above(v, s):   # result[l] = v[(l + s) % cw]
        return pltpu.roll(v, shift=((cw - s) if roll_is_neg else s), axis=1)

    # Lane-aligned chunks of the stacked tile; the whole network works on this
    # list so coarse-stride stages never touch the XLU.
    chunks = [
        x_ref[:, g * cw:(g + 1) * cw].astype(sort_dtype)
        for g in range(num_chunks)
    ]

    # Bitonic sorting network (each row sorted independently, ascending).
    k = 2
    while k <= npad:
        # ascending = (i & k) == 0; depends only on the lane when k < chunk_w,
        # otherwise it is constant per chunk (a Python bool -> free selects).
        asc_mask = ((lane & k) == 0) if k < cw else None
        j = k // 2
        while j >= 1:
            if j >= cw:
                # Partner lives in another chunk, same lane: pure static
                # min/max exchange -- no rolls, no masks, no selects.
                jg = j // cw
                for g in range(num_chunks):
                    if g & jg:
                        continue
                    h = g + jg
                    asc = ((g * cw) & k) == 0
                    mn = jnp.minimum(chunks[g], chunks[h])
                    mx = jnp.maximum(chunks[g], chunks[h])
                    chunks[g], chunks[h] = (mn, mx) if asc else (mx, mn)
            else:
                # Intra-chunk exchange in mn/mx keep/send form:
                # 2 XLU rolls + {3 or 5} VPU ops per chunk per stage.
                is_lower = (lane & j) == 0
                for g in range(num_chunks):
                    x = chunks[g]
                    r = roll_from_below(x, j)          # partner value at upper pos
                    mn = jnp.minimum(x, r)
                    mx = jnp.maximum(x, r)
                    if asc_mask is None:
                        if ((g * cw) & k) == 0:
                            keep, send = mx, mn        # static -> free
                        else:
                            keep, send = mn, mx
                    else:
                        keep = jnp.where(asc_mask, mx, mn)
                        send = jnp.where(asc_mask, mn, mx)
                    chunks[g] = jnp.where(
                        is_lower, roll_from_above(send, j), keep)
            j //= 2
        k *= 2

    # Squared differences of the sorted gen/tgt halves.  The +inf lane padding
    # sorts to the same global tail positions in both halves; mask it out of
    # the sum (robust even if inf - inf produced NaN).
    acc = jnp.zeros((tb, cw), jnp.float32)
    for g in range(num_chunks):
        start = g * cw
        if start >= n_valid:
            break                                   # pure-padding chunks
        c = chunks[g]
        d = c[:tb, :].astype(jnp.float32) - c[tb:, :].astype(jnp.float32)
        sq = d * d
        rem = n_valid - start
        if rem < cw:
            sq = jnp.where(lane < rem, sq, 0.0)
        acc = acc + sq
    o_ref[...] = jnp.sum(acc, axis=1, keepdims=True)


def earth_move_distance(generated_feature, target_feature, size_average=True):
    assert generated_feature.shape == target_feature.shape
    B = generated_feature.shape[0]
    gen = generated_feature.reshape(B, -1)
    tgt = target_feature.reshape(B, -1)
    N = gen.shape[1]

    info = _chip_info()
    in_dtype = jnp.dtype(gen.dtype)

    # Sort in bf16 only on chips with a native bf16 VALU (v6e/v7x): halves the
    # vregs per roll/min/max/select.  Never downcast wider inputs.
    if in_dtype == jnp.bfloat16 and info["bf16_vpu"]:
        sort_dtype = jnp.bfloat16
    else:
        sort_dtype = jnp.float32

    # Lane pad to a power of two (>= 128) with +inf: pads sort to the tail of
    # both rows and are masked out of the sum inside the kernel.
    Np = max(_LANE, 1 << (N - 1).bit_length())
    if Np != N:
        gen = jnp.pad(gen, ((0, 0), (0, Np - N)), constant_values=jnp.inf)
        tgt = jnp.pad(tgt, ((0, 0), (0, Np - N)), constant_values=jnp.inf)

    # Chunk width for the sort: 128 lanes when it keeps the trace small, wider
    # for very large feature maps so compile time stays bounded.
    chunk_w = max(_LANE, Np // 16)

    sort_isz = jnp.dtype(sort_dtype).itemsize
    in_isz = in_dtype.itemsize

    def _tile_bytes(tb):
        rows = 2 * tb
        return (2 * rows * Np * in_isz       # double-buffered input block
                + 2 * rows * Np * sort_isz   # live chunk list + stage temps
                + rows * 4                   # output block
                + (1 << 20))                 # masks / compiler scratch slack

    default_scoped = info["default_scoped"]
    vmem_cap = int(0.85 * info["physical"])  # leave headroom (esp. v7x 64 MiB)

    # Adaptive batch tile: stacked sort operates on 2*TB rows.
    min_tb = 8 if sort_dtype == jnp.bfloat16 else 4   # one stacked vreg tall
    if B <= min_tb:
        TB = min_tb
    elif B <= 8:
        TB = 8
    else:
        TB = 8
        # Amortize per-step overhead for large B / small Np, but keep >= 2
        # grid steps (megacore sharding on v7x) and a modest VMEM footprint.
        while (TB < 64
               and (B + 2 * TB - 1) // (2 * TB) >= 2
               and _tile_bytes(2 * TB) <= min(vmem_cap, 24 << 20)):
            TB *= 2

    B_pad = ((B + TB - 1) // TB) * TB
    if B_pad != B:
        # Zero rows contribute exactly 0 to the loss.
        gen = jnp.pad(gen, ((0, B_pad - B), (0, 0)))
        tgt = jnp.pad(tgt, ((0, B_pad - B), (0, 0)))

    nt = B_pad // TB
    # Stack gen over tgt per batch tile OUTSIDE the kernel (XLA copy) so one
    # sorting network handles both inputs and the kernel reads a single
    # lane-dense (2*TB, Np) block.
    if nt == 1:
        stacked = jnp.concatenate([gen, tgt], axis=0)
    else:
        stacked = jnp.concatenate(
            [gen.reshape(nt, TB, Np), tgt.reshape(nt, TB, Np)], axis=1
        ).reshape(nt * 2 * TB, Np)

    need = _tile_bytes(TB)
    vmem_limit = None
    if need > (3 * default_scoped) // 4:
        vmem_limit = int(min(max(need + (4 << 20), default_scoped), vmem_cap))
    # TODO(synk): if `need` exceeds vmem_cap (huge C*H*W), an N-tiled
    # chunk-sort + bitonic-merge path over HBM-resident data (manual DMA) is
    # required; the single-shot in-VMEM sort will spill there.

    kernel = functools.partial(
        _emd_kernel,
        n_valid=N,
        chunk_w=chunk_w,
        sort_dtype=sort_dtype,
        roll_is_neg=_pltpu_roll_is_neg(),
    )

    per_row = pl.pallas_call(
        kernel,
        out_shape=jax.ShapeDtypeStruct((B_pad, 1), jnp.float32),
        grid=(nt,),
        in_specs=[pl.BlockSpec((2 * TB, Np), lambda i: (i, 0))],
        out_specs=pl.BlockSpec((TB, 1), lambda i: (i, 0)),
        compiler_params=pltpu.CompilerParams(
            dimension_semantics=("parallel",),
            vmem_limit_bytes=vmem_limit,
        ),
    )(stacked)

    total = jnp.sum(per_row[:B, 0])
    if size_average:
        total = total / B
    return total


if __name__ == "__main__":
    key = jax.random.PRNGKey(0)

    def reference(g4, t4, size_average=True):
        b = g4.shape[0]
        g = jnp.sort(g4.reshape(b, -1), axis=1).astype(jnp.float32)
        t = jnp.sort(t4.reshape(b, -1), axis=1).astype(jnp.float32)
        per_row = jnp.sum((g - t) ** 2, axis=1)
        return jnp.mean(per_row) if size_average else jnp.sum(per_row)

    # Test 1: canonical small shape (B, C, H, W) = (2, 4, 16, 16), f32.
    k1, k2 = jax.random.split(key)
    gen = jax.random.normal(k1, (2, 4, 16, 16), dtype=jnp.float32)
    tgt = jax.random.normal(k2, (2, 4, 16, 16), dtype=jnp.float32)
    loss = jax.block_until_ready(earth_move_distance(gen, tgt, size_average=True))
    ref = reference(gen, tgt, True)
    assert jnp.allclose(loss, ref, rtol=1e-4, atol=1e-5), (float(loss), float(ref))

    # Test 2: non-power-of-two feature size + batch > tile (exercises +inf lane
    # padding / tail mask, zero-row batch padding, multi-tile grid), sum mode.
    k3, k4 = jax.random.split(k2)
    gen2 = jax.random.normal(k3, (10, 3, 9, 11), dtype=jnp.float32)
    tgt2 = jax.random.normal(k4, (10, 3, 9, 11), dtype=jnp.float32)
    loss2 = jax.block_until_ready(earth_move_distance(gen2, tgt2, size_average=False))
    ref2 = reference(gen2, tgt2, False)
    assert jnp.allclose(loss2, ref2, rtol=1e-4, atol=1e-4), (float(loss2), float(ref2))

    # Test 3: bf16 inputs (bf16 sort path on v6e/v7x, f32 sort path elsewhere).
    k5, k6 = jax.random.split(k4)
    gen3 = jax.random.normal(k5, (6, 2, 8, 8), dtype=jnp.bfloat16)
    tgt3 = jax.random.normal(k6, (6, 2, 8, 8), dtype=jnp.bfloat16)
    loss3 = jax.block_until_ready(earth_move_distance(gen3, tgt3, size_average=True))
    ref3 = reference(gen3, tgt3, True)
    assert jnp.allclose(loss3, ref3, rtol=1e-3, atol=1e-3), (float(loss3), float(ref3))

    print("KERNEL_OK")
</pallas_src>

<mosaic_0001>
module attributes {stable_mosaic.version = 11 : i64} {
  func.func @probe(%arg0: memref<8x128xi32, #tpu.memory_space<vmem>>, %arg1: memref<8x128xi32, #tpu.memory_space<vmem>>) attributes {dimension_semantics = [], scalar_prefetch = 0 : i64, scratch_operands = 0 : i64, tpu.core_type = #tpu.core_type<tc>} {
    %c0 = arith.constant 0 : index
    %c0_0 = arith.constant 0 : index
    %0 = vector.load %arg0[%c0, %c0_0] : memref<8x128xi32, #tpu.memory_space<vmem>>, vector<8x128xi32>
    %c1_i32 = arith.constant 1 : i32
    %1 = tpu.dynamic_rotate %0 by %c1_i32 dim 1 : vector<8x128xi32>, i32 -> vector<8x128xi32>
    %c0_1 = arith.constant 0 : index
    %c0_2 = arith.constant 0 : index
    %2 = vector.load %arg1[%c0_1, %c0_2] : memref<8x128xi32, #tpu.memory_space<vmem>>, vector<8x128xi32>
    tpu.vector_store %arg1[%c0_1, %c0_2], %1 {strides = array<i32>} : memref<8x128xi32, #tpu.memory_space<vmem>>, vector<8x128xi32>,
    return
  }
}

</mosaic_0001>

<llo_original>
// kernel: tpu_custom_call.1
$region0: #{tpu_custom_call.1}
  #allocation0 [shape = 'u32[]', space=smem, size = 0x4, offset = 0x4, fixed_abs, tag = 'smem constant byte address 0x4 - core index']
  #allocation1 [shape = 'u32[144,128]{1,0:T(1,128)}', space=vmem, size = 0x12000, scoped, tag = 'internal scratch']
  %s0 = inlined_call_operand.hbm [shape: s32[8,128], index: 0, kind: input, shape index: {}]
  %s1 = inlined_call_operand.hbm [shape: s32[8,128], index: 1, kind: output, shape index: {}]
  %s2 = sld [smem:[#allocation0]]
  $region18: #{tpu_custom_call.1} parent=0
    _
  %s4 = ssub.s32 1, %s2
  %s5 = scalar_select 0, %s4, %s2
  $region1: #{tpu_custom_call.1} parent=0
    #allocation2 [shape = 'u8[4096]{0}', space=vmem, size = 0x1000, scoped, tag = 'input window, operand 0, single buffered']
    #allocation3 [shape = 's32[1]{0}', space=sflag, size = 0x4, scoped, tag = 'scoped memory for tpu_custom_call.1']
    #allocation4 [shape = 's32[1]{0}', space=sflag, size = 0x4, scoped, tag = 'scoped memory for tpu_custom_call.1']
    #allocation5 [shape = 'u8[4096]{0}', space=vmem, size = 0x1000, scoped, tag = 'output window, operand 0, single buffered']
    %6 = vsyncpa [#allocation3], 0
    %7 = vsyncpa [#allocation4], 0
    // Predicated region
    $region2: #{tpu_custom_call.1} parent=1 // pred_check
      _
    $region3: #{tpu_custom_call.1} parent=1 // pred_check_branch
      %9 = sbr.rel (0) target = $region5
    $region4: #{tpu_custom_call.1} parent=1 // pred_region
      %s11 = ssub.s32 128, 128
      %12 = vsyncadd [#allocation3], %s11
      %s14 = sshll.u32 [#allocation2], 4
      %s15 = int_to_ptr.vmem [resolvable:$true] %s14
      %17 = dma.hbm_to_vmem [thread:$0]  %s0, 128, %s15, [#allocation3]
    $region5: #{tpu_custom_call.1} parent=1 // pred_fallthru
      _
    // Predicated region
    $region6: #{tpu_custom_call.1} parent=1 // pred_check
      _
    $region7: #{tpu_custom_call.1} parent=1 // pred_check_branch
      %19 = sbr.rel (0) target = $region9
    $region8: #{tpu_custom_call.1} parent=1 // pred_region
      %20 = dma.done [#allocation3], 128
    $region9: #{tpu_custom_call.1} parent=1 // pred_fallthru
      _
    %v21 = vld [vmem:[#allocation2] sm:$0xff]
    %22 = vrot.lane.b32.xlu0 %v21, 1
    %v23 = vpop.permute.xlu0 %22
    %24 = vst [vmem:[#allocation5] sm:$0xff] %v23
    // Predicated region
    $region10: #{tpu_custom_call.1} parent=1 // pred_check
      _
    $region11: #{tpu_custom_call.1} parent=1 // pred_check_branch
      %26 = sbr.rel (0) target = $region13
    $region12: #{tpu_custom_call.1} parent=1 // pred_region
      %s28 = ssub.s32 128, 128
      %29 = vsyncadd [#allocation4], %s28
      %s31 = sshll.u32 [#allocation5], 4
      %s32 = int_to_ptr.vmem [resolvable:$true] %s31
      %34 = dma.vmem_to_hbm [thread:$0]  %s32, 128, %s1, [#allocation4]
    $region13: #{tpu_custom_call.1} parent=1 // pred_fallthru
      _
    // Predicated region
    $region14: #{tpu_custom_call.1} parent=1 // pred_check
      _
    $region15: #{tpu_custom_call.1} parent=1 // pred_check_branch
      %36 = sbr.rel (0) target = $region17
    $region16: #{tpu_custom_call.1} parent=1 // pred_region
      %37 = dma.done [#allocation4], 128
    $region17: #{tpu_custom_call.1} parent=1 // pred_fallthru
      _
    %38 = vsyncpa [#allocation3], 1
    %39 = vsyncpa [#allocation4], 1

</llo_original>
